<compile_context>
chip_gen: v7x
topology: tpu7x:2x2x1
jax: 0.10.0
libtpu: 0.0.40
codegen_flags: <defaults>
</compile_context>

<pallas_src>
import jax
import jax.numpy as jnp
from jax.experimental import pallas as pl
from jax.experimental.pallas import tpu as pltpu


def _concat_embed_kernel(x_ref, pad_ref, o_ref):
    # x_ref:   (tm, d)      input rows
    # pad_ref: (1, e)       learned padding vector (broadcast over rows)
    # o_ref:   (tm, d + e)  output rows = [x, padding]
    rows = x_ref.shape[0]
    e = pad_ref.shape[1]
    pad_rows = jnp.broadcast_to(pad_ref[...], (rows, e))
    # Build the full output tile in-register and store it once.
    o_ref[...] = jnp.concatenate([x_ref[...], pad_rows], axis=-1)


def _round_up(n, m):
    return ((n + m - 1) // m) * m


def concat_embedding(
    x,
    padding,
    *,
    max_tile_rows=8192,
    tile_vmem_budget_bytes=20 * 1024 * 1024,
):
    """Forward pass of ConcatEmbedding: concat(x, padding) along the last axis.

    x:       (..., input_size)
    padding: (padding_size,)
    returns  (..., input_size + padding_size)
    """
    d = x.shape[-1]
    e = padding.shape[0]
    out_size = d + e
    lead_shape = x.shape[:-1]

    if e == 0:  # degenerate: nothing to concatenate
        return x

    n_rows = 1
    for s in lead_shape:
        n_rows *= s

    if d == 0:  # degenerate: output is just the broadcast padding
        return jnp.broadcast_to(padding.astype(x.dtype), (*lead_shape, e))

    x2d = x.reshape(n_rows, d)
    pad2d = padding.reshape(1, e).astype(x.dtype)

    itemsize = jnp.dtype(x.dtype).itemsize
    # Sub-32-bit dtypes pack along sublanes: keep the row tile a multiple of the
    # packing factor (8 rows f32, 16 bf16, 32 int8/fp8).
    row_align = 8 * max(1, 4 // itemsize)

    # Largest row tile whose double-buffered (input + output) tiles fit the budget.
    bytes_per_row = 2 * (d + out_size) * itemsize  # 2x for Pallas double buffering
    tm = max(row_align, tile_vmem_budget_bytes // bytes_per_row)
    tm = min(tm, max_tile_rows, _round_up(n_rows, row_align))
    # Ensure >= 2 grid steps when there is enough work, so v7x's two TCs both get rows.
    if n_rows > row_align and pl.cdiv(n_rows, tm) < 2:
        tm = _round_up(pl.cdiv(n_rows, 2), row_align)
    tm = _round_up(tm, row_align)

    grid = (pl.cdiv(n_rows, tm),)

    out2d = pl.pallas_call(
        _concat_embed_kernel,
        out_shape=jax.ShapeDtypeStruct((n_rows, out_size), x.dtype),
        grid_spec=pltpu.PrefetchScalarGridSpec(
            num_scalar_prefetch=0,
            grid=grid,
            in_specs=[
                pl.BlockSpec((tm, d), lambda i: (i, 0)),
                pl.BlockSpec((1, e), lambda i: (0, 0)),
            ],
            out_specs=pl.BlockSpec((tm, out_size), lambda i: (i, 0)),
        ),
        compiler_params=pltpu.CompilerParams(
            dimension_semantics=("parallel",),
            # Safe on every chip (v7x has 64 MiB physical); raises v5e's 16 MiB default.
            vmem_limit_bytes=32 * 1024 * 1024,
        ),
    )(x2d, pad2d)

    return out2d.reshape(*lead_shape, out_size)


if __name__ == "__main__":
    # ConcatEmbedding(input_size=32, output_size=48) -> padding_size = 16
    input_size = 32
    output_size = 48
    padding_size = output_size - input_size

    key = jax.random.PRNGKey(0)
    kx, kp = jax.random.split(key)

    batch, seq = 2, 8
    x = jax.random.normal(kx, (batch, seq, input_size), dtype=jnp.float32)
    # deterministic "parameter" (stands in for torch.randn(padding_size))
    padding = jax.random.normal(kp, (padding_size,), dtype=jnp.float32)

    out = concat_embedding(x, padding)
    out = jax.block_until_ready(out)

    # reference check (plain JAX)
    ref = jnp.concatenate(
        [x, jnp.broadcast_to(padding, (batch, seq, padding_size))], axis=-1
    )
    assert out.shape == (batch, seq, output_size), out.shape
    assert jnp.allclose(out, ref), "mismatch vs reference"

    print("KERNEL_OK")
</pallas_src>

<mosaic_0001>
module attributes {stable_mosaic.version = 11 : i64} {
  func.func @_concat_embed_kernel(%arg0: i32, %arg1: memref<8x32xf32, #tpu.memory_space<vmem>>, %arg2: memref<1x16xf32, #tpu.memory_space<vmem>>, %arg3: memref<8x48xf32, #tpu.memory_space<vmem>>) attributes {dimension_semantics = [#tpu.dimension_semantics<parallel>], iteration_bounds = array<i64: 2>, scalar_prefetch = 0 : i64, scratch_operands = 0 : i64, tpu.core_type = #tpu.core_type<tc>, window_params = [{transform_indices = @transform_0, window_bounds = array<i64: 8, 32>}, {pipeline_mode = #tpu.pipeline_mode<synchronous>, transform_indices = @transform_1, window_bounds = array<i64: 1, 16>}, {transform_indices = @transform_2, window_bounds = array<i64: 8, 48>}]} {
    %c0 = arith.constant 0 : index
    %c0_0 = arith.constant 0 : index
    %0 = vector.load %arg2[%c0, %c0_0] : memref<1x16xf32, #tpu.memory_space<vmem>>, vector<1x16xf32>
    %1 = vector.shape_cast %0 : vector<1x16xf32> to vector<1x16xf32>
    %2 = vector.broadcast %1 : vector<1x16xf32> to vector<8x16xf32>
    %c0_1 = arith.constant 0 : index
    %c0_2 = arith.constant 0 : index
    %3 = vector.load %arg1[%c0_1, %c0_2] : memref<8x32xf32, #tpu.memory_space<vmem>>, vector<8x32xf32>
    %4 = tpu.concatenate %3, %2 in 1 : vector<8x32xf32>, vector<8x16xf32> -> vector<8x48xf32>
    %c0_3 = arith.constant 0 : index
    %c0_4 = arith.constant 0 : index
    %5 = vector.load %arg3[%c0_3, %c0_4] : memref<8x48xf32, #tpu.memory_space<vmem>>, vector<8x48xf32>
    tpu.vector_store %arg3[%c0_3, %c0_4], %4 {strides = array<i32>} : memref<8x48xf32, #tpu.memory_space<vmem>>, vector<8x48xf32>,
    return
  }
  func.func @transform_0(%arg0: i32) -> (i32, i32) {
    %c0_i32 = arith.constant 0 : i32
    %c0_i32_0 = arith.constant 0 : i32
    return %arg0, %c0_i32 : i32, i32
  }
  func.func @transform_1(%arg0: i32) -> (i32, i32) {
    %c0_i32 = arith.constant 0 : i32
    %c0_i32_0 = arith.constant 0 : i32
    %c0_i32_1 = arith.constant 0 : i32
    return %c0_i32, %c0_i32_0 : i32, i32
  }
  func.func @transform_2(%arg0: i32) -> (i32, i32) {
    %c0_i32 = arith.constant 0 : i32
    %c0_i32_0 = arith.constant 0 : i32
    return %arg0, %c0_i32 : i32, i32
  }
}

</mosaic_0001>

<llo_original>
// kernel: tpu_custom_call.1
$region0: #{tpu_custom_call.1}
  #allocation0 [shape = 'u32[]', space=smem, size = 0x4, offset = 0x4, fixed_abs, tag = 'smem constant byte address 0x4 - core index']
  #allocation1 [shape = 'u32[144,128]{1,0:T(1,128)}', space=vmem, size = 0x12000, scoped, tag = 'internal scratch']
  %s0 = inlined_call_operand.hbm [shape: f32[16,32], index: 0, kind: input, shape index: {}]
  %s1 = inlined_call_operand.vmem [shape: f32[1,16], index: 1, kind: input, shape index: {}]
  %s2 = inlined_call_operand.hbm [shape: f32[16,48], index: 2, kind: output, shape index: {}]
  %s3 = sld [smem:[#allocation0]]
  $region45: #{tpu_custom_call.1} parent=0
    _
  %s5 = ssub.s32 1, %s3
  %s6 = scalar_select 0, %s5, %s3
  $region1: #{tpu_custom_call.1} parent=0
    #allocation2 [shape = 'u8[8192]{0}', space=vmem, size = 0x2000, scoped, tag = 'input window, operand 0']
    #allocation3 [shape = 's32[2]{0}', space=sflag, size = 0x8, scoped, tag = 'scoped memory for tpu_custom_call.1']
    #allocation4 [shape = 's32[2]{0}', space=sflag, size = 0x8, scoped, tag = 'scoped memory for tpu_custom_call.1']
    #allocation5 [shape = 'u8[8192]{0}', space=vmem, size = 0x2000, scoped, tag = 'output window, operand 0']
    %7 = vsyncpa [#allocation3], 0
    %s8 = scalar_lea.sflag [#allocation3], 1
    %9 = vsyncpa %s8, 0
    %10 = vsyncpa [#allocation4], 0
    %s11 = scalar_lea.sflag [#allocation4], 1
    %12 = vsyncpa %s11, 0
    loop: start=0, step=1, limit=4
    $region2: #{tpu_custom_call.1} parent=1 // loop_pre_header
      _
    $region3: #{tpu_custom_call.1} parent=1 // loop_header
      %s14 = sphi 0, %s18
      %p15 = scmp.ge.s32.totalorder %s14, 4
      %s24 = sphi 0, %s26
      %s27 = sphi 0, %s24
      %s28 = sphi 0, %s27
      %s44 = sphi 0, %s28
      %s48 = sphi 0, %s48
      %s50 = sphi 0, %s48
      %s51 = sphi 0, %s50
      %s65 = sphi 0, %s51
      %s71 = sphi 0, %s73
      %s74 = sphi 0, %s71
      %s75 = sphi 0, %s74
      %s91 = sphi 0, %s75
    $region4: #{tpu_custom_call.1} parent=1 // loop_header_branch
      %17 = sbr.rel (%p15) target = $region8
    $region5: #{tpu_custom_call.1} parent=1 // loop_body
      %s19 = ssub.s32 %s14, 1
      %s20 = ssub.s32 %s14, 2
      %s21 = sadd.s32 %s14, 1
      %s22 = ssub.s32 %s14, %s21
      %p23 = scmp.eq.s32.totalorder %s22, 0
      %s25 = sadd.s32 %s24, 1
      %s26 = scalar_select %p23, %s24, %s25
      %p29 = pneg %p23
      %p30 = scmp.eq.s32.totalorder %s14, 1
      %p31 = por %p29, %p30
      %p32 = scmp.ne.s32.totalorder %s24, %s27
      %p33 = scmp.eq.s32.totalorder %s14, 0
      %p34 = por %p32, %p33
      %p35 = scmp.ne.s32.totalorder %s24, %s27
      %p36 = scmp.eq.s32.totalorder %s19, 1
      %p37 = por %p35, %p36
      %p38 = scmp.ne.s32.totalorder %s27, %s28
      %p39 = scmp.eq.s32.totalorder %s19, 0
      %p40 = por %p38, %p39
      %p41 = scmp.ne.s32.totalorder %s27, %s28
      %p42 = scmp.eq.s32.totalorder %s20, 1
      %p43 = por %p41, %p42
      %p45 = scmp.ne.s32.totalorder %s28, %s44
      %p46 = scmp.eq.s32.totalorder %s20, 0
      %p47 = por %p45, %p46
      %s49 = sadd.s32 %s48, 1
      %p52 = scmp.eq.s32.totalorder %s14, 1
      %p53 = scmp.ne.s32.totalorder %s48, %s50
      %p54 = scmp.eq.s32.totalorder %s14, 0
      %p55 = por %p53, %p54
      %p56 = scmp.ne.s32.totalorder %s48, %s50
      %p57 = scmp.eq.s32.totalorder %s19, 1
      %p58 = por %p56, %p57
      %p59 = scmp.ne.s32.totalorder %s50, %s51
      %p60 = scmp.eq.s32.totalorder %s19, 0
      %p61 = por %p59, %p60
      %p62 = scmp.ne.s32.totalorder %s50, %s51
      %p63 = scmp.eq.s32.totalorder %s20, 1
      %p64 = por %p62, %p63
      %p66 = scmp.ne.s32.totalorder %s51, %s65
      %p67 = scmp.eq.s32.totalorder %s20, 0
      %p68 = por %p66, %p67
      %s69 = ssub.s32 %s14, %s21
      %p70 = scmp.eq.s32.totalorder %s69, 0
      %s72 = sadd.s32 %s71, 1
      %s73 = scalar_select %p70, %s71, %s72
      %p76 = pneg %p70
      %p77 = scmp.eq.s32.totalorder %s14, 1
      %p78 = por %p76, %p77
      %p79 = scmp.ne.s32.totalorder %s71, %s74
      %p80 = scmp.eq.s32.totalorder %s14, 0
      %p81 = por %p79, %p80
      %p82 = scmp.ne.s32.totalorder %s71, %s74
      %p83 = scmp.eq.s32.totalorder %s19, 1
      %p84 = por %p82, %p83
      %p85 = scmp.ne.s32.totalorder %s74, %s75
      %p86 = scmp.eq.s32.totalorder %s19, 0
      %p87 = por %p85, %p86
      %p88 = scmp.ne.s32.totalorder %s74, %s75
      %p89 = scmp.eq.s32.totalorder %s20, 1
      %p90 = por %p88, %p89
      %p92 = scmp.ne.s32.totalorder %s75, %s91
      %p93 = scmp.eq.s32.totalorder %s20, 0
      %p94 = por %p92, %p93
      %p95 = scmp.le.s32.totalorder 1, %s14
      %p96 = scmp.lt.s32.totalorder %s14, 3
      %p97 = pnand %p95, %p96
      %p98 = pneg %p97
      // Predicated region
      $region9: #{tpu_custom_call.1} parent=5 // pred_check
        _
      $region10: #{tpu_custom_call.1} parent=5 // pred_check_branch
        %100 = sbr.rel (%p97) target = $region12
      $region11: #{tpu_custom_call.1} parent=5 // pred_region
        %s101 = ssub.s32 %s14, 1
        // Predicated region
        $region13: #{tpu_custom_call.1} parent=11 // pred_check
          %p102 = pneg %p61
        $region14: #{tpu_custom_call.1} parent=11 // pred_check_branch
          %104 = sbr.rel (%p102) target = $region16
        $region15: #{tpu_custom_call.1} parent=11 // pred_region
          _
        $region16: #{tpu_custom_call.1} parent=11 // pred_fallthru
          _
      $region12: #{tpu_custom_call.1} parent=5 // pred_fallthru
        _
      %p105 = scmp.lt.s32.totalorder %s14, 2
      // Predicated region
      $region17: #{tpu_custom_call.1} parent=5 // pred_check
        %p106 = pneg %p105
      $region18: #{tpu_custom_call.1} parent=5 // pred_check_branch
        %108 = sbr.rel (%p106) target = $region20
      $region19: #{tpu_custom_call.1} parent=5 // pred_region
        // Predicated region
        $region21: #{tpu_custom_call.1} parent=19 // pred_check
          %p109 = pneg %p34
        $region22: #{tpu_custom_call.1} parent=19 // pred_check_branch
          %111 = sbr.rel (%p109) target = $region24
        $region23: #{tpu_custom_call.1} parent=19 // pred_region
          %s112 = sand.u32 %s24, 1
          %s113 = scalar_lea.sflag [#allocation3], %s112
          %s114 = sand.u32 %s24, 1
          %s115 = smul.addr %s114, 8
          %s116 = scalar_lea.vmem [#allocation2], %s115
          %s118 = ssub.s32 128, 128
          %119 = vsyncadd %s113, %s118
          %s120 = smul.addr %s14, 128
          %s121 = scalar_lea.hbm %s0, %s120
          %s123 = sshll.u32 %s116, 4
          %s124 = int_to_ptr.vmem [resolvable:$true] %s123
          %126 = dma.hbm_to_vmem [thread:$0]  %s121, 128, %s124, %s113
        $region24: #{tpu_custom_call.1} parent=19 // pred_fallthru
          _
      $region20: #{tpu_custom_call.1} parent=5 // pred_fallthru
        _
      %p127 = scmp.le.s32.totalorder 1, %s14
      %p128 = scmp.lt.s32.totalorder %s14, 3
      %p129 = pnand %p127, %p128
      %p130 = pneg %p129
      // Predicated region
      $region25: #{tpu_custom_call.1} parent=5 // pred_check
        _
      $region26: #{tpu_custom_call.1} parent=5 // pred_check_branch
        %132 = sbr.rel (%p129) target = $region28
      $region27: #{tpu_custom_call.1} parent=5 // pred_region
        %s133 = ssub.s32 %s14, 1
        %s134 = sand.u32 %s27, 1
        %s135 = scalar_lea.sflag [#allocation3], %s134
        %s136 = sand.u32 %s27, 1
        %s137 = smul.addr %s136, 8
        %s138 = scalar_lea.vmem [#allocation2], %s137
        // Predicated region
        $region29: #{tpu_custom_call.1} parent=27 // pred_check
          %p139 = pneg %p40
        $region30: #{tpu_custom_call.1} parent=27 // pred_check_branch
          %141 = sbr.rel (%p139) target = $region32
        $region31: #{tpu_custom_call.1} parent=27 // pred_region
          %142 = dma.done %s135, 128
        $region32: #{tpu_custom_call.1} parent=27 // pred_fallthru
          _
        %s143 = sand.u32 %s27, 1
        %s144 = scalar_lea.sflag [#allocation3], %s143
        %s145 = sand.u32 %s27, 1
        %s146 = smul.addr %s145, 8
        %s147 = scalar_lea.vmem [#allocation2], %s146
        %p148 = pneg %p40
        %p149 = pneg %p37
        %p150 = pneg %p61
        %p151 = pneg %p58
        %p152 = pneg %p87
        %p153 = pneg %p84
        %s154 = sand.u32 %s74, 1
        %s155 = scalar_lea.sflag [#allocation4], %s154
        %s156 = sand.u32 %s74, 1
        %s157 = smul.addr %s156, 8
        %s158 = scalar_lea.vmem [#allocation5], %s157
        %v159 = vld [vmem:[%s1] sm:$0x1]
        %v161 = vlaneseq
        %v162 = vshrl.u32 %v161, 7
        %v163 = vsub.s32 0, %v162
        %v164 = vrot.slane %v159, %v163
        %v165 = vld [vmem:[%s138] sm:$0xff]
        %166 = vrot.lane.b32.xlu0 %v164, 32
        %v167 = vpop.permute.xlu0 %166
        %vm169 = vcmask 261120
        %v170 = vsel %vm169, %v165, %v167
        %vm171 = vcmask 392192
        %172 = vst.msk [vmem:[%s158] sm:$0xff] %vm171, %v170
        %s173 = sand.u32 %s74, 1
        %s174 = scalar_lea.sflag [#allocation4], %s173
        %s175 = sand.u32 %s74, 1
        %s176 = smul.addr %s175, 8
        %s177 = scalar_lea.vmem [#allocation5], %s176
        // Predicated region
        $region33: #{tpu_custom_call.1} parent=27 // pred_check
          %p178 = pneg %p84
        $region34: #{tpu_custom_call.1} parent=27 // pred_check_branch
          %180 = sbr.rel (%p178) target = $region36
        $region35: #{tpu_custom_call.1} parent=27 // pred_region
          %s182 = ssub.s32 128, 128
          %183 = vsyncadd %s174, %s182
          %s184 = smul.addr %s19, 128
          %s185 = scalar_lea.hbm %s2, %s184
          %s187 = sshll.u32 %s177, 4
          %s188 = int_to_ptr.vmem [resolvable:$true] %s187
          %190 = dma.vmem_to_hbm [thread:$0]  %s188, 128, %s185, %s174
        $region36: #{tpu_custom_call.1} parent=27 // pred_fallthru
          _
      $region28: #{tpu_custom_call.1} parent=5 // pred_fallthru
        _
      %p191 = scmp.le.s32.totalorder 2, %s14
      // Predicated region
      $region37: #{tpu_custom_call.1} parent=5 // pred_check
        %p192 = pneg %p191
      $region38: #{tpu_custom_call.1} parent=5 // pred_check_branch
        %194 = sbr.rel (%p192) target = $region40
      $region39: #{tpu_custom_call.1} parent=5 // pred_region
        %s195 = ssub.s32 %s14, 2
        // Predicated region
        $region41: #{tpu_custom_call.1} parent=39 // pred_check
          %p196 = pneg %p90
        $region42: #{tpu_custom_call.1} parent=39 // pred_check_branch
          %198 = sbr.rel (%p196) target = $region44
        $region43: #{tpu_custom_call.1} parent=39 // pred_region
          %s199 = sand.u32 %s75, 1
          %s200 = scalar_lea.sflag [#allocation4], %s199
          %s201 = sand.u32 %s75, 1
          %s202 = smul.addr %s201, 8
          %s203 = scalar_lea.vmem [#allocation5], %s202
          %204 = dma.done %s200, 128
        $region44: #{tpu_custom_call.1} parent=39 // pred_fallthru
          _
      $region40: #{tpu_custom_call.1} parent=5 // pred_fallthru
        _
    $region6: #{tpu_custom_call.1} parent=1 // loop_footer
      %s18 = sadd.s32 1, %s14
    $region7: #{tpu_custom_call.1} parent=1 // loop_footer_branch
      %13 = sbr.rel target = $region3
    $region8: #{tpu_custom_call.1} parent=1 // loop_exit
      _
    %205 = vsyncpa [#allocation3], 1
    %s206 = scalar_lea.sflag [#allocation3], 1
    %207 = vsyncpa %s206, 1
    %208 = vsyncpa [#allocation4], 1
    %s209 = scalar_lea.sflag [#allocation4], 1
    %210 = vsyncpa %s209, 1

</llo_original>
